<compile_context>
chip_gen: v6e
topology: v6e:2x2x1
jax: 0.10.0
libtpu: 0.0.40
codegen_flags: <defaults>
</compile_context>

<pallas_src>
import functools

import jax
import jax.numpy as jnp
from jax.experimental import pallas as pl
from jax.experimental.pallas import tpu as pltpu


def _round_up(x, m):
    return (x + m - 1) // m * m


def _vmem_usable_bytes():
    """Generation-aware usable-VMEM budget (never the full physical VMEM)."""
    cap = 128 * 1024 * 1024
    try:
        info = pltpu.get_tpu_info()
        cap = int(getattr(info, "vmem_capacity_bytes", cap))
    except Exception:
        pass
    # ~80% of physical, capped at 112 MiB on 128 MiB parts; ~51 MiB on v7x.
    return int(min(cap * 0.8, 112 * 1024 * 1024))


# --------------------------------------------------------------------------
# Dropout pre-pass: memory-bound, reads x once, writes masked x (unscaled).
# --------------------------------------------------------------------------
def _dropout_kernel(seed_ref, x_ref, o_ref, *, p):
    """o = where(keep, x, 0).  The keep mask depends only on
    (seed, global_row, col), so it is independent of how the downstream matmul
    is tiled (matches torch's dropout-then-matmul semantics)."""
    x = x_ref[...]
    tm = x.shape[0]
    row = (jax.lax.broadcasted_iota(jnp.int32, x.shape, 0)
           + pl.program_id(0) * tm).astype(jnp.uint32)
    col = jax.lax.broadcasted_iota(jnp.int32, x.shape, 1).astype(jnp.uint32)
    seed_u = seed_ref[0].astype(jnp.uint32)

    # Counter-based murmur-style finalizer -> 32 uniform bits per element.
    h = seed_u ^ (row * jnp.uint32(0x9E3779B1)) ^ (col * jnp.uint32(0x85EBCA6B))
    h = h ^ (h >> jnp.uint32(16))
    h = h * jnp.uint32(0x7FEB352D)
    h = h ^ (h >> jnp.uint32(15))
    h = h * jnp.uint32(0x846CA68B)
    h = h ^ (h >> jnp.uint32(16))

    thresh = jnp.uint32(min(int(round(p * 4294967296.0)), 0xFFFFFFFF))
    keep = h >= thresh
    # NO 1/(1-p) scaling here: it is applied once to the f32 accumulator in
    # the matmul kernel (avoids per-element multiplies and bf16 rounding bias).
    o_ref[...] = jnp.where(keep, x, jnp.zeros_like(x)).astype(o_ref.dtype)


def _apply_dropout(x2d, seed_arr, p, out_dtype, tm, vmem_usable):
    Mp, Dp = x2d.shape
    bytes_per_row = Dp * (x2d.dtype.itemsize + jnp.dtype(out_dtype).itemsize)
    tmd = 8
    for cand in (tm, 256, 128, 64, 32, 16, 8):
        if (cand <= tm and cand % 8 == 0 and Mp % cand == 0
                and 2 * cand * bytes_per_row + (2 << 20) <= vmem_usable):
            tmd = cand
            break
    vmem_bytes = int(min(max(2 * tmd * bytes_per_row + (2 << 20), 8 << 20),
                         vmem_usable))
    return pl.pallas_call(
        functools.partial(_dropout_kernel, p=float(p)),
        out_shape=jax.ShapeDtypeStruct((Mp, Dp), out_dtype),
        grid_spec=pltpu.PrefetchScalarGridSpec(
            num_scalar_prefetch=1,
            grid=(Mp // tmd,),
            in_specs=[pl.BlockSpec((tmd, Dp), lambda i, seed: (i, 0))],
            out_specs=pl.BlockSpec((tmd, Dp), lambda i, seed: (i, 0)),
        ),
        compiler_params=pltpu.CompilerParams(
            dimension_semantics=("parallel",),
            vmem_limit_bytes=vmem_bytes),
    )(seed_arr, x2d)


# --------------------------------------------------------------------------
# Linear kernel: pure MXU matmul + f32 accumulation (+ fused dropout scale).
# --------------------------------------------------------------------------
def _linear_kernel(x_ref, w_ref, b_ref, o_ref, acc_ref, *, inv_keep):
    k = pl.program_id(2)

    @pl.when(k == 0)
    def _():
        acc_ref[...] = jnp.zeros_like(acc_ref)

    acc_ref[...] += jnp.dot(x_ref[...], w_ref[...],
                            preferred_element_type=jnp.float32)

    @pl.when(k == pl.num_programs(2) - 1)
    def _():
        acc = acc_ref[...]
        if inv_keep != 1.0:
            acc = acc * jnp.float32(inv_keep)   # dropout 1/(1-p), once, in f32
        acc = acc + b_ref[...].astype(jnp.float32)
        o_ref[...] = acc.astype(o_ref.dtype)


def _choose_tiles(M, D, V, itm_in, itm_out, vmem_usable, tm_req, tn_req):
    """Pick (tm, tn, tk) so the double-buffered footprint fits the VMEM budget."""
    big_vmem = vmem_usable >= 90 * 1024 * 1024
    tm = min(tm_req if tm_req else 512, _round_up(M, 8))
    tn = min(tn_req if tn_req else (2048 if big_vmem else 1024),
             _round_up(V, 128))

    def footprint(tm_, tn_, tk_):
        return (2 * (tm_ * tk_ + tk_ * tn_ + tn_) * itm_in   # double-buffered inputs
                + 2 * tm_ * tn_ * itm_out                     # double-buffered output
                + tm_ * tn_ * 4                               # f32 accumulator scratch
                + (2 << 20))                                  # headroom

    def fits(tm_, tn_, tk_):
        return footprint(tm_, tn_, tk_) <= vmem_usable

    tk = D  # prefer the whole reduction dim resident (K axis of extent 1)
    while not fits(tm, tn, tk) and tn > 128:
        tn = max(128, (tn // 2) // 128 * 128)
    while not fits(tm, tn, tk) and tm > 8:
        tm = max(8, (tm // 2) // 8 * 8)
    if not fits(tm, tn, tk):
        # K-tile the reduction dim (D gets zero-padded to a multiple of tk).
        for cand in (2048, 1024, 512, 256, 128):
            if cand < D and fits(tm, tn, cand):
                tk = cand
                break
        else:
            if D > 128:
                tk = 128
    return tm, tn, tk


def output_layer(x, w_t, b, seed, *, p=0.1, training=False,
                 tm=None, tn=None, matmul_in_bf16=True):
    """x: (B, S, D); w_t: (D, V) (transposed nn.Linear weight); b: (V,).
    Returns dropout(x) @ w_t + b, shape (B, S, V)."""
    B, S, D = x.shape
    V = w_t.shape[1]
    M = B * S
    if training:
        assert 0.0 <= p < 1.0, "dropout p must be in [0, 1) in training mode"

    in_dtype = x.dtype
    mm_dtype = jnp.bfloat16 if (matmul_in_bf16 and in_dtype == jnp.float32) else in_dtype
    out_dtype = in_dtype
    itm_mm = jnp.dtype(mm_dtype).itemsize
    itm_out = jnp.dtype(out_dtype).itemsize

    vmem_usable = _vmem_usable_bytes()
    tm_eff, tn_eff, tk_eff = _choose_tiles(M, D, V, itm_mm, itm_out,
                                           vmem_usable, tm, tn)

    Mp = _round_up(M, tm_eff)
    Vp = _round_up(V, tn_eff)
    Dp = D if tk_eff == D else _round_up(D, tk_eff)

    # --- prepare operands (pads/casts skipped entirely when already aligned) ---
    x2d = x.reshape(M, D)
    if Mp != M or Dp != D:
        x2d = jnp.pad(x2d, ((0, Mp - M), (0, Dp - D)))

    w_p = w_t
    if Dp != D or Vp != V:
        # TODO(synk): for a real LM head, pad/cast the weight once at init time
        # instead of per call (this copies D*V bytes through HBM every call).
        w_p = jnp.pad(w_t, ((0, Dp - D), (0, Vp - V)))
    if w_p.dtype != mm_dtype:
        w_p = w_p.astype(mm_dtype)

    b2d = b.reshape(1, V).astype(jnp.float32)
    if Vp != V:
        b2d = jnp.pad(b2d, ((0, 0), (0, Vp - V)))

    seed_arr = jnp.asarray([seed], dtype=jnp.int32)

    # --- dropout pre-pass (memory-bound; x touched once) ---
    if training and p > 0.0:
        x_mm = _apply_dropout(x2d, seed_arr, p, mm_dtype, tm_eff, vmem_usable)
        inv_keep = 1.0 / (1.0 - p)
    else:
        x_mm = x2d.astype(mm_dtype) if x2d.dtype != mm_dtype else x2d
        inv_keep = 1.0

    # --- MXU matmul: vocab tiles outer, row tiles inner, K innermost ---
    grid = (Vp // tn_eff, Mp // tm_eff, Dp // tk_eff)
    n_k = grid[2]

    flops = 2 * Mp * Dp * Vp
    w_reads = 1 if n_k == 1 else grid[1]   # weight re-streamed per row tile iff K-tiled
    bytes_accessed = (Mp * Dp * itm_mm * grid[0]       # x re-read once per vocab tile
                      + Dp * Vp * itm_mm * w_reads
                      + Vp * 4
                      + Mp * Vp * itm_out)
    cost = pl.CostEstimate(flops=flops, transcendentals=0,
                           bytes_accessed=bytes_accessed)

    vmem_bytes = (2 * (tm_eff * tk_eff + tk_eff * tn_eff + tn_eff) * itm_mm
                  + 2 * tm_eff * tn_eff * itm_out
                  + tm_eff * tn_eff * 4
                  + (2 << 20))
    vmem_bytes = int(min(max(vmem_bytes, 16 * 1024 * 1024), vmem_usable))

    kernel = functools.partial(_linear_kernel, inv_keep=float(inv_keep))

    # TODO(synk): verify with xprof that the two "parallel" axes shard across
    # both v7x TensorCores; if not, switch the row axis to CORE_PARALLEL.
    out2d = pl.pallas_call(
        kernel,
        out_shape=jax.ShapeDtypeStruct((Mp, Vp), out_dtype),
        grid_spec=pltpu.PrefetchScalarGridSpec(
            num_scalar_prefetch=0,
            grid=grid,
            in_specs=[
                pl.BlockSpec((tm_eff, tk_eff), lambda j, i, k: (i, k)),  # x tile
                pl.BlockSpec((tk_eff, tn_eff), lambda j, i, k: (k, j)),  # weight slab
                pl.BlockSpec((1, tn_eff), lambda j, i, k: (0, j)),       # bias tile
            ],
            out_specs=pl.BlockSpec((tm_eff, tn_eff), lambda j, i, k: (i, j)),
            scratch_shapes=[pltpu.VMEM((tm_eff, tn_eff), jnp.float32)],
        ),
        compiler_params=pltpu.CompilerParams(
            dimension_semantics=("parallel", "parallel", "arbitrary"),
            vmem_limit_bytes=vmem_bytes),
        cost_estimate=cost,
    )(x_mm, w_p, b2d)

    if Mp != M or Vp != V:
        out2d = out2d[:M, :V]
    return out2d.reshape(B, S, V)


if __name__ == "__main__":
    # Shapes implied by the module: (batch, seq, d_model) -> (batch, seq, vocab)
    B, S, D, V = 2, 8, 32, 128
    p_drop = 0.1

    key = jax.random.PRNGKey(0)
    kx, kw, kb = jax.random.split(key, 3)

    x = jax.random.normal(kx, (B, S, D), dtype=jnp.float32)
    # nn.Linear(d_model, vocab_size): weight (V, D), bias (V,), U(-1/sqrt(D), 1/sqrt(D))
    bound = 1.0 / (D ** 0.5)
    w = jax.random.uniform(kw, (V, D), dtype=jnp.float32, minval=-bound, maxval=bound)
    b = jax.random.uniform(kb, (V,), dtype=jnp.float32, minval=-bound, maxval=bound)
    w_t = w.T  # (D, V) layout for the kernel

    ref = x.reshape(-1, D) @ w_t + b

    # Eval mode, exact f32 MXU path.
    out_f32 = jax.block_until_ready(
        output_layer(x, w_t, b, seed=0, p=p_drop, training=False,
                     matmul_in_bf16=False))
    assert jnp.allclose(out_f32.reshape(-1, V), ref, atol=1e-5, rtol=1e-5), \
        "eval-mode (f32) mismatch vs reference"

    # Eval mode, default bf16 MXU path (f32 accumulation).
    out_bf16 = jax.block_until_ready(
        output_layer(x, w_t, b, seed=0, p=p_drop, training=False))
    assert jnp.allclose(out_bf16.reshape(-1, V), ref, atol=3e-2, rtol=3e-2), \
        "eval-mode (bf16 matmul) mismatch vs reference"

    # Training mode: exercises the dropout pre-pass; stochastic but seeded.
    out_tr1 = jax.block_until_ready(
        output_layer(x, w_t, b, seed=1234, p=p_drop, training=True))
    out_tr2 = jax.block_until_ready(
        output_layer(x, w_t, b, seed=1234, p=p_drop, training=True))
    assert out_tr1.shape == (B, S, V)
    assert bool(jnp.all(jnp.isfinite(out_tr1)))
    assert jnp.allclose(out_tr1, out_tr2), "training mode not deterministic per seed"

    # Non-aligned shapes exercise the padded row / vocab tile path.
    B2, S2, D2, V2 = 3, 5, 32, 200
    x2 = jax.random.normal(kx, (B2, S2, D2), dtype=jnp.float32)
    w2 = jax.random.uniform(kw, (V2, D2), dtype=jnp.float32, minval=-bound, maxval=bound)
    b2 = jax.random.uniform(kb, (V2,), dtype=jnp.float32, minval=-bound, maxval=bound)
    out2 = jax.block_until_ready(
        output_layer(x2, w2.T, b2, seed=0, p=p_drop, training=False,
                     matmul_in_bf16=False))
    ref2 = x2.reshape(-1, D2) @ w2.T + b2
    assert jnp.allclose(out2.reshape(-1, V2), ref2, atol=1e-5, rtol=1e-5), \
        "padded-tile mismatch vs reference"

    print("KERNEL_OK")
</pallas_src>

<mosaic_0001>
module attributes {stable_mosaic.version = 11 : i64} {
  func.func @_linear_kernel(%arg0: i32, %arg1: i32, %arg2: i32, %arg3: memref<16x32xf32, #tpu.memory_space<vmem>>, %arg4: memref<32x128xf32, #tpu.memory_space<vmem>>, %arg5: memref<1x128xf32, #tpu.memory_space<vmem>>, %arg6: memref<16x128xf32, #tpu.memory_space<vmem>>, %arg7: memref<16x128xf32, #tpu.memory_space<vmem>>) attributes {dimension_semantics = [#tpu.dimension_semantics<parallel>, #tpu.dimension_semantics<parallel>, #tpu.dimension_semantics<arbitrary>], iteration_bounds = array<i64: 1, 1, 1>, scalar_prefetch = 0 : i64, scratch_operands = 1 : i64, tpu.core_type = #tpu.core_type<tc>, window_params = [{transform_indices = @transform_0, window_bounds = array<i64: 16, 32>}, {transform_indices = @transform_1, window_bounds = array<i64: 32, 128>}, {transform_indices = @transform_2, window_bounds = array<i64: 1, 128>}, {transform_indices = @transform_3, window_bounds = array<i64: 16, 128>}]} {
    %c0_i32 = arith.constant 0 : i32
    %0 = arith.cmpi eq, %arg2, %c0_i32 : i32
    %1 = arith.extui %0 : i1 to i32
    %c0_i32_0 = arith.constant 0 : i32
    %2 = arith.cmpi ne, %1, %c0_i32_0 : i32
    scf.if %2 {
      %cst_10 = arith.constant 0.000000e+00 : f32
      %12 = vector.broadcast %cst_10 : f32 to vector<16x128xf32>
      %c0_11 = arith.constant 0 : index
      %c0_12 = arith.constant 0 : index
      %13 = vector.load %arg7[%c0_11, %c0_12] : memref<16x128xf32, #tpu.memory_space<vmem>>, vector<16x128xf32>
      tpu.vector_store %arg7[%c0_11, %c0_12], %12 {strides = array<i32>} : memref<16x128xf32, #tpu.memory_space<vmem>>, vector<16x128xf32>,
    } else {
    }
    %c0 = arith.constant 0 : index
    %c0_1 = arith.constant 0 : index
    %3 = vector.load %arg7[%c0, %c0_1] : memref<16x128xf32, #tpu.memory_space<vmem>>, vector<16x128xf32>
    %c0_2 = arith.constant 0 : index
    %c0_3 = arith.constant 0 : index
    %4 = vector.load %arg3[%c0_2, %c0_3] : memref<16x32xf32, #tpu.memory_space<vmem>>, vector<16x32xf32>
    %c0_4 = arith.constant 0 : index
    %c0_5 = arith.constant 0 : index
    %5 = vector.load %arg4[%c0_4, %c0_5] : memref<32x128xf32, #tpu.memory_space<vmem>>, vector<32x128xf32>
    %cst = arith.constant dense<0.000000e+00> : vector<16x128xf32>
    %6 = tpu.matmul %4, %5, %cst {dimension_numbers = #tpu.dot_dimension_numbers<[1], [0], [0], [1], [0, 0, 1, 1], [], []>} : vector<16x32xf32>, vector<32x128xf32>, vector<16x128xf32> -> vector<16x128xf32>
    %7 = arith.addf %3, %6 : vector<16x128xf32>
    %c0_6 = arith.constant 0 : index
    %c0_7 = arith.constant 0 : index
    %8 = vector.load %arg7[%c0_6, %c0_7] : memref<16x128xf32, #tpu.memory_space<vmem>>, vector<16x128xf32>
    tpu.vector_store %arg7[%c0_6, %c0_7], %7 {strides = array<i32>} : memref<16x128xf32, #tpu.memory_space<vmem>>, vector<16x128xf32>,
    %c0_i32_8 = arith.constant 0 : i32
    %9 = arith.cmpi eq, %arg2, %c0_i32_8 : i32
    %10 = arith.extui %9 : i1 to i32
    %c0_i32_9 = arith.constant 0 : i32
    %11 = arith.cmpi ne, %10, %c0_i32_9 : i32
    scf.if %11 {
      %c0_10 = arith.constant 0 : index
      %c0_11 = arith.constant 0 : index
      %12 = vector.load %arg7[%c0_10, %c0_11] : memref<16x128xf32, #tpu.memory_space<vmem>>, vector<16x128xf32>
      %c0_12 = arith.constant 0 : index
      %c0_13 = arith.constant 0 : index
      %13 = vector.load %arg5[%c0_12, %c0_13] : memref<1x128xf32, #tpu.memory_space<vmem>>, vector<1x128xf32>
      %14 = vector.broadcast %13 : vector<1x128xf32> to vector<16x128xf32>
      %15 = arith.addf %12, %14 : vector<16x128xf32>
      %c0_14 = arith.constant 0 : index
      %c0_15 = arith.constant 0 : index
      %16 = vector.load %arg6[%c0_14, %c0_15] : memref<16x128xf32, #tpu.memory_space<vmem>>, vector<16x128xf32>
      tpu.vector_store %arg6[%c0_14, %c0_15], %15 {strides = array<i32>} : memref<16x128xf32, #tpu.memory_space<vmem>>, vector<16x128xf32>,
    } else {
    }
    return
  }
  func.func @transform_0(%arg0: i32, %arg1: i32, %arg2: i32) -> (i32, i32) {
    %c0_i32 = arith.constant 0 : i32
    return %arg1, %arg2 : i32, i32
  }
  func.func @transform_1(%arg0: i32, %arg1: i32, %arg2: i32) -> (i32, i32) {
    %c0_i32 = arith.constant 0 : i32
    return %arg2, %arg0 : i32, i32
  }
  func.func @transform_2(%arg0: i32, %arg1: i32, %arg2: i32) -> (i32, i32) {
    %c0_i32 = arith.constant 0 : i32
    %c0_i32_0 = arith.constant 0 : i32
    return %c0_i32, %arg0 : i32, i32
  }
  func.func @transform_3(%arg0: i32, %arg1: i32, %arg2: i32) -> (i32, i32) {
    %c0_i32 = arith.constant 0 : i32
    return %arg1, %arg0 : i32, i32
  }
}

</mosaic_0001>

<llo_original>
// kernel: tpu_custom_call.1
$region0: #{tpu_custom_call.1}
  #allocation0 [shape = 'u32[]', space=smem, size = 0x4, offset = 0x4, fixed_abs, tag = 'smem constant byte address 0x4 - core index']
  #allocation1 [shape = 'u32[144,128]{1,0:T(1,128)}', space=vmem, size = 0x12000, scoped, tag = 'internal scratch']
  #allocation2 [shape = 'f32[16,128]{1,0:T(8,128)}', space=vmem, size = 0x2000, scoped, tag = 'scratch operand']
  %s0 = inlined_call_operand.hbm [shape: f32[16,32], index: 0, kind: input, shape index: {}]
  %s1 = inlined_call_operand.hbm [shape: f32[32,128], index: 1, kind: input, shape index: {}]
  %s2 = inlined_call_operand.vmem [shape: f32[1,128], index: 2, kind: input, shape index: {}]
  %s3 = inlined_call_operand.hbm [shape: f32[16,128], index: 3, kind: output, shape index: {}]
  %s4 = sld [smem:[#allocation0]]
  $region38: #{tpu_custom_call.1} parent=0
    _
  %s6 = ssub.s32 1, %s4
  %s7 = scalar_select 0, %s6, %s4
  $region1: #{tpu_custom_call.1} parent=0
    #allocation3 [shape = 'u8[8192]{0}', space=vmem, size = 0x2000, scoped, tag = 'input window, operand 0, single buffered']
    #allocation4 [shape = 's32[1]{0}', space=sflag, size = 0x4, scoped, tag = 'scoped memory for tpu_custom_call.1']
    #allocation5 [shape = 's32[1]{0}', space=sflag, size = 0x4, scoped, tag = 'scoped memory for tpu_custom_call.1']
    #allocation6 [shape = 'u8[16384]{0}', space=vmem, size = 0x4000, scoped, tag = 'input window, operand 1, single buffered']
    #allocation7 [shape = 's32[1]{0}', space=sflag, size = 0x4, scoped, tag = 'scoped memory for tpu_custom_call.1']
    #allocation8 [shape = 'u8[8192]{0}', space=vmem, size = 0x2000, scoped, tag = 'output window, operand 0, single buffered']
    %8 = vsyncpa [#allocation4], 0
    %9 = vsyncpa [#allocation7], 0
    %10 = vsyncpa [#allocation5], 0
    // Predicated region
    $region2: #{tpu_custom_call.1} parent=1 // pred_check
      _
    $region3: #{tpu_custom_call.1} parent=1 // pred_check_branch
      %12 = sbr.rel (0) target = $region5
    $region4: #{tpu_custom_call.1} parent=1 // pred_region
      %s14 = ssub.s32 256, 256
      %15 = vsyncadd [#allocation4], %s14
      %s16 = sshll.u32 [#allocation3], 4
      %s17 = int_to_ptr.vmem [resolvable:$true] %s16
      %22 = dma.hbm_to_vmem [thread:$0]  %s0, 256, %s17, [#allocation4], 128, 128, 8
    $region5: #{tpu_custom_call.1} parent=1 // pred_fallthru
      _
    // Predicated region
    $region6: #{tpu_custom_call.1} parent=1 // pred_check
      _
    $region7: #{tpu_custom_call.1} parent=1 // pred_check_branch
      %24 = sbr.rel (0) target = $region9
    $region8: #{tpu_custom_call.1} parent=1 // pred_region
      %s26 = ssub.s32 512, 512
      %27 = vsyncadd [#allocation7], %s26
      %s28 = sshll.u32 [#allocation6], 4
      %s29 = int_to_ptr.vmem [resolvable:$true] %s28
      %34 = dma.hbm_to_vmem [thread:$0]  %s1, 512, %s29, [#allocation7], 128, 128, 8
    $region9: #{tpu_custom_call.1} parent=1 // pred_fallthru
      _
    // Predicated region
    $region10: #{tpu_custom_call.1} parent=1 // pred_check
      _
    $region11: #{tpu_custom_call.1} parent=1 // pred_check_branch
      %36 = sbr.rel (0) target = $region13
    $region12: #{tpu_custom_call.1} parent=1 // pred_region
      _
    $region13: #{tpu_custom_call.1} parent=1 // pred_fallthru
      _
    // Predicated region
    $region14: #{tpu_custom_call.1} parent=1 // pred_check
      _
    $region15: #{tpu_custom_call.1} parent=1 // pred_check_branch
      %38 = sbr.rel (0) target = $region17
    $region16: #{tpu_custom_call.1} parent=1 // pred_region
      %39 = dma.done [#allocation4], 256
    $region17: #{tpu_custom_call.1} parent=1 // pred_fallthru
      _
    // Predicated region
    $region18: #{tpu_custom_call.1} parent=1 // pred_check
      _
    $region19: #{tpu_custom_call.1} parent=1 // pred_check_branch
      %41 = sbr.rel (0) target = $region21
    $region20: #{tpu_custom_call.1} parent=1 // pred_region
      %42 = dma.done [#allocation7], 512
    $region21: #{tpu_custom_call.1} parent=1 // pred_fallthru
      _
    %p43 = scmp.eq.s32.totalorder 0, 0
    // Predicated region
    $region22: #{tpu_custom_call.1} parent=1 // pred_check
      %p44 = pneg %p43
    $region23: #{tpu_custom_call.1} parent=1 // pred_check_branch
      %46 = sbr.rel (%p44) target = $region25
    $region24: #{tpu_custom_call.1} parent=1 // pred_region
      %47 = vst [vmem:[#allocation2] sm:$0xff] 0.0
      %48 = vst [vmem:[#allocation2 + $0x8] sm:$0xff] 0.0
    $region25: #{tpu_custom_call.1} parent=1 // pred_fallthru
      _
    %v49 = vld [vmem:[#allocation2] sm:$0xff]
    %v50 = vld [vmem:[#allocation2 + $0x8] sm:$0xff]
    %v51 = vld [vmem:[#allocation3] sm:$0xff]
    %v52 = vld [vmem:[#allocation3 + $0x8] sm:$0xff]
    %v53 = vld [vmem:[#allocation6] sm:$0xff]
    %v54 = vld [vmem:[#allocation6 + $0x8] sm:$0xff]
    %v55 = vld [vmem:[#allocation6 + $0x10] sm:$0xff]
    %v56 = vld [vmem:[#allocation6 + $0x18] sm:$0xff]
    %vm57 = vcmask 261120
    %v59 = vsel %vm57, %v51, 0
    %v62 = vsel %vm57, %v52, 0
    %64 = vmatprep.subr.mxu0 0.0
    %65 = vmatpush1.msra.mxu0 0.0
    %66 = vmatprep.subr.mxu0 0.0
    %67 = vmatpush1.msra.mxu0 0.0
    %68 = vmatprep.subr.mxu0 0.0
    %69 = vmatpush1.msra.mxu0 0.0
    %70 = vmatprep.subr.mxu0 0.0
    %71 = vmatpush1.msra.mxu0 0.0
    %72 = vmatprep.subr.mxu0 0.0
    %73 = vmatpush1.msra.mxu0 0.0
    %74 = vmatprep.subr.mxu0 0.0
    %75 = vmatpush1.msra.mxu0 0.0
    %76 = vmatprep.subr.mxu0 0.0
    %77 = vmatpush1.msra.mxu0 0.0
    %78 = vmatprep.subr.mxu0 0.0
    %79 = vmatpush1.msra.mxu0 0.0
    %80 = vmatprep.subr.mxu0 0.0
    %81 = vmatpush1.msra.mxu0 0.0
    %82 = vmatprep.subr.mxu0 0.0
    %83 = vmatpush1.msra.mxu0 0.0
    %84 = vmatprep.subr.mxu0 0.0
    %85 = vmatpush1.msra.mxu0 0.0
    %86 = vmatprep.subr.mxu0 0.0
    %87 = vmatpush1.msra.mxu0 0.0
    %88 = vmatprep.subr.mxu0 0.0
    %89 = vmatpush1.msra.mxu0 %v56
    %90 = vmatprep.subr.mxu0 0.0
    %91 = vmatpush1.msra.mxu0 %v55
    %92 = vmatprep.subr.mxu0 0.0
    %93 = vmatpush1.msra.mxu0 %v54
    %94 = vmatprep.subr.mxu0 0.0
    %95 = vmatpush1.msra.mxu0 %v53
    %96 = vmatprep.subr.mxu0 0.0
    %97 = vmatpush2.msra.mxu0 0.0
    %98 = vmatprep.subr.mxu0 0.0
    %99 = vmatpush2.msra.mxu0 0.0
    %100 = vmatprep.subr.mxu0 0.0
    %101 = vmatpush2.msra.mxu0 0.0
    %102 = vmatprep.subr.mxu0 0.0
    %103 = vmatpush2.msra.mxu0 0.0
    %104 = vmatprep.subr.mxu0 0.0
    %105 = vmatpush2.msra.mxu0 0.0
    %106 = vmatprep.subr.mxu0 0.0
    %107 = vmatpush2.msra.mxu0 0.0
    %108 = vmatprep.subr.mxu0 0.0
    %109 = vmatpush2.msra.mxu0 0.0
    %110 = vmatprep.subr.mxu0 0.0
    %111 = vmatpush2.msra.mxu0 0.0
    %112 = vmatprep.subr.mxu0 0.0
    %113 = vmatpush2.msra.mxu0 0.0
    %114 = vmatprep.subr.mxu0 0.0
    %115 = vmatpush2.msra.mxu0 0.0
    %116 = vmatprep.subr.mxu0 0.0
    %117 = vmatpush2.msra.mxu0 0.0
    %118 = vmatprep.subr.mxu0 0.0
    %119 = vmatpush2.msra.mxu0 0.0
    %120 = vmatprep.subr.mxu0 0.0
    %121 = vmatpush2.msra.mxu0 0.0
    %122 = vmatprep.subr.mxu0 0.0
    %123 = vmatpush2.msra.mxu0 0.0
    %124 = vmatprep.subr.mxu0 0.0
    %125 = vmatpush2.msra.mxu0 0.0
    %126 = vmatprep.subr.mxu0 0.0
    %127 = vmatpush2.msra.mxu0 0.0
    %128 = vmatprep.mubr.f32.mxu0 0.0
    %129 = vmatmul.mubr.f32.gmra.mxu0 %v59
    %v130 = vpop.f32.mrf.mxu0
    %v131 = vadd.f32 0.0, %v130
    %v132 = vpop.f32.mrf.mxu0
    %133 = vmatprep.mubr.f32.mxu0 0.0
    %134 = vmatmul.mubr.f32.gmra.mxu0 %v62
    %v135 = vpop.f32.mrf.mxu0
    %v136 = vadd.f32 0.0, %v135
    %v137 = vpop.f32.mrf.mxu0
    %138 = vdwg.mxu0
    %v139 = vadd.f32 %v49, %v131
    %v140 = vadd.f32 %v50, %v136
    %141 = vst [vmem:[#allocation2] sm:$0xff] %v139
    %142 = vst [vmem:[#allocation2 + $0x8] sm:$0xff] %v140
    // Predicated region
    $region26: #{tpu_custom_call.1} parent=1 // pred_check
      %p143 = pneg %p43
    $region27: #{tpu_custom_call.1} parent=1 // pred_check_branch
      %145 = sbr.rel (%p143) target = $region29
    $region28: #{tpu_custom_call.1} parent=1 // pred_region
      %v146 = vld [vmem:[#allocation2] sm:$0xff]
      %v147 = vld [vmem:[#allocation2 + $0x8] sm:$0xff]
      %v148 = vld [vmem:[%s2] sm:$0x1]
      %v150 = vlaneseq
      %v151 = vshrl.u32 %v150, 7
      %v152 = vsub.s32 0, %v151
      %v153 = vrot.slane %v148, %v152
      %v155 = vadd.f32 %v146, %v153
      %v156 = vadd.f32 %v147, %v153
      %157 = vst [vmem:[#allocation8] sm:$0xff] %v155
      %158 = vst [vmem:[#allocation8 + $0x8] sm:$0xff] %v156
    $region29: #{tpu_custom_call.1} parent=1 // pred_fallthru
      _
    // Predicated region
    $region30: #{tpu_custom_call.1} parent=1 // pred_check
      _
    $region31: #{tpu_custom_call.1} parent=1 // pred_check_branch
      %160 = sbr.rel (0) target = $region33
    $region32: #{tpu_custom_call.1} parent=1 // pred_region
      %s162 = ssub.s32 256, 256
      %163 = vsyncadd [#allocation5], %s162
      %s164 = sshll.u32 [#allocation8], 4
      %s165 = int_to_ptr.vmem [resolvable:$true] %s164
      %170 = dma.vmem_to_hbm [thread:$0]  %s165, 256, %s3, [#allocation5], 128, 128, 8
    $region33: #{tpu_custom_call.1} parent=1 // pred_fallthru
      _
    // Predicated region
    $region34: #{tpu_custom_call.1} parent=1 // pred_check
      _
    $region35: #{tpu_custom_call.1} parent=1 // pred_check_branch
      %172 = sbr.rel (0) target = $region37
    $region36: #{tpu_custom_call.1} parent=1 // pred_region
      %173 = dma.done [#allocation5], 256
    $region37: #{tpu_custom_call.1} parent=1 // pred_fallthru
      _
    %174 = vsyncpa [#allocation4], 1
    %175 = vsyncpa [#allocation7], 1
    %176 = vsyncpa [#allocation5], 1

</llo_original>
